<compile_context>
chip_gen: v7x
topology: tpu7x:2x2x1
jax: 0.10.0
libtpu: 0.0.40
codegen_flags: <defaults>
</compile_context>

<pallas_src>
import jax
import jax.numpy as jnp
from jax.experimental import pallas as pl
from jax.experimental.pallas import tpu as pltpu

IN_FEATURES = 2
HIDDEN = 3

_LANE = 128            # lane width
_MAX_LANE_TILE = 2048  # batch lanes per grid step (amortizes per-step overhead)


def _sigmoid(z):
    # exp and the (exact) reciprocal both lower to the EUP path, keeping the
    # VALU slots free for the broadcast multiply-adds.
    # (pl.reciprocal(..., approx=True) is available if lower precision is ok.)
    return pl.reciprocal(1.0 + jnp.exp(-z))


def simple_nn_kernel(w1_ref, b1_ref, w2_ref, b2_ref, x_ref, o_ref):
    """One batch-lane tile of the 2 -> 3 -> 1 MLP.

    x_ref : (2, TB)  VMEM, batch on the lane axis (lane-dense loads)
    o_ref : (1, TB)  VMEM, lane-dense stores
    w*/b* : SMEM scalars broadcast into VPU FMAs (no jnp.dot / MXU)
    """
    x0 = x_ref[0:1, :]          # (1, TB)
    x1 = x_ref[1:2, :]          # (1, TB)

    acc = jnp.full_like(x0, b2_ref[0])
    for j in range(HIDDEN):     # fully unrolled: 3 hidden units
        z = w1_ref[0, j] * x0 + w1_ref[1, j] * x1 + b1_ref[j]
        acc = acc + w2_ref[j] * _sigmoid(z)

    o_ref[...] = _sigmoid(acc)


def simple_nn_forward_pallas(x, w1, b1, w2, b2):
    """x: (B, 2) float32 -> (B, 1) float32 via the Pallas kernel."""
    B = x.shape[0]
    assert x.shape[1] == IN_FEATURES

    # Batch goes on the lane (last) axis -> lane-dense input & output.
    xt = x.astype(jnp.float32).T                      # (2, B)

    # Lane tiling: one padded tile for small B, 2048-lane tiles for large B.
    if B <= _MAX_LANE_TILE:
        tb = _LANE * pl.cdiv(B, _LANE)
        n_tiles = 1
    else:
        tb = _MAX_LANE_TILE
        n_tiles = pl.cdiv(B, tb)
    b_pad = n_tiles * tb
    if b_pad != B:
        xt = jnp.pad(xt, ((0, 0), (0, b_pad - B)))

    smem = pl.BlockSpec(memory_space=pltpu.MemorySpace.SMEM)
    out = pl.pallas_call(
        simple_nn_kernel,
        out_shape=jax.ShapeDtypeStruct((1, b_pad), jnp.float32),
        grid=(n_tiles,),
        in_specs=[
            smem,                                             # w1 (2, 3)
            smem,                                             # b1 (3,)
            smem,                                             # w2 (3,)
            smem,                                             # b2 (1,)
            pl.BlockSpec((IN_FEATURES, tb), lambda i: (0, i)),  # x  (2, TB)
        ],
        out_specs=pl.BlockSpec((1, tb), lambda i: (0, i)),
        compiler_params=pltpu.CompilerParams(
            dimension_semantics=("parallel",)),
    )(w1, b1, w2, b2, xt)

    return out[:, :B].T                                # (B, 1)


def reference_forward(x, w1, b1, w2, b2):
    h = jax.nn.sigmoid(x @ w1 + b1[None, :])
    return jax.nn.sigmoid(h @ w2[:, None] + b2[None, :])


def simple_nn_forward(x, w1, b1, w2, b2):
    """Dispatch: tiny batches are cheaper as a fused XLA elementwise graph."""
    if x.shape[0] < 512:
        return reference_forward(x, w1, b1, w2, b2)
    return simple_nn_forward_pallas(x, w1, b1, w2, b2)


def init_params(key):
    """nn.Linear-style init: U(-1/sqrt(fan_in), 1/sqrt(fan_in)).

    Weights stored as (in_features, out_features) — transpose of PyTorch.
    """
    k1, k2, k3, k4 = jax.random.split(key, 4)
    bound1 = 1.0 / jnp.sqrt(2.0)  # layer1 fan_in = 2
    bound2 = 1.0 / jnp.sqrt(3.0)  # layer2 fan_in = 3
    w1 = jax.random.uniform(k1, (2, 3), jnp.float32, -bound1, bound1)
    b1 = jax.random.uniform(k2, (3,), jnp.float32, -bound1, bound1)
    w2 = jax.random.uniform(k3, (3,), jnp.float32, -bound2, bound2)
    b2 = jax.random.uniform(k4, (1,), jnp.float32, -bound2, bound2)
    return w1, b1, w2, b2


if __name__ == "__main__":
    key = jax.random.PRNGKey(0)
    k_x, k_x2, k_p = jax.random.split(key, 3)
    params = init_params(k_p)

    # Module-scale batch (single padded lane tile).
    x_small = jax.random.normal(k_x, (8, IN_FEATURES), dtype=jnp.float32)
    out_small = jax.block_until_ready(simple_nn_forward_pallas(x_small, *params))
    ref_small = reference_forward(x_small, *params)
    assert out_small.shape == (8, 1), out_small.shape
    assert jnp.allclose(out_small, ref_small, atol=1e-5, rtol=1e-5)

    # Larger batch exercising the 1-D parallel grid (multiple lane tiles).
    x_big = jax.random.normal(k_x2, (4096, IN_FEATURES), dtype=jnp.float32)
    out_big = jax.block_until_ready(simple_nn_forward_pallas(x_big, *params))
    ref_big = reference_forward(x_big, *params)
    assert out_big.shape == (4096, 1), out_big.shape
    assert jnp.allclose(out_big, ref_big, atol=1e-5, rtol=1e-5)

    print("KERNEL_OK")
</pallas_src>

<mosaic_0001>
module attributes {stable_mosaic.version = 11 : i64} {
  func.func @simple_nn_kernel(%arg0: i32, %arg1: memref<2x3xf32, #tpu.memory_space<smem>>, %arg2: memref<3xf32, #tpu.memory_space<smem>>, %arg3: memref<3xf32, #tpu.memory_space<smem>>, %arg4: memref<1xf32, #tpu.memory_space<smem>>, %arg5: memref<2x128xf32, #tpu.memory_space<vmem>>, %arg6: memref<1x128xf32, #tpu.memory_space<vmem>>) attributes {dimension_semantics = [#tpu.dimension_semantics<parallel>], iteration_bounds = array<i64: 1>, scalar_prefetch = 0 : i64, scratch_operands = 0 : i64, tpu.core_type = #tpu.core_type<tc>, window_params = [{transform_indices = @transform_0, window_bounds = array<i64: 2, 3>}, {transform_indices = @transform_1, window_bounds = array<i64: 3>}, {transform_indices = @transform_2, window_bounds = array<i64: 3>}, {transform_indices = @transform_3, window_bounds = array<i64: 1>}, {transform_indices = @transform_4, window_bounds = array<i64: 2, 128>}, {transform_indices = @transform_5, window_bounds = array<i64: 1, 128>}]} {
    %c0 = arith.constant 0 : index
    %c0_0 = arith.constant 0 : index
    %0 = vector.load %arg5[%c0, %c0_0] : memref<2x128xf32, #tpu.memory_space<vmem>>, vector<1x128xf32>
    %c1 = arith.constant 1 : index
    %c0_1 = arith.constant 0 : index
    %1 = vector.load %arg5[%c1, %c0_1] : memref<2x128xf32, #tpu.memory_space<vmem>>, vector<1x128xf32>
    %c0_2 = arith.constant 0 : index
    %2 = memref.load %arg4[%c0_2] : memref<1xf32, #tpu.memory_space<smem>>
    %3 = vector.broadcast %2 : f32 to vector<1x128xf32>
    %c0_3 = arith.constant 0 : index
    %c0_4 = arith.constant 0 : index
    %4 = memref.load %arg1[%c0_3, %c0_4] : memref<2x3xf32, #tpu.memory_space<smem>>
    %5 = vector.broadcast %4 : f32 to vector<1x128xf32>
    %6 = arith.mulf %5, %0 : vector<1x128xf32>
    %c1_5 = arith.constant 1 : index
    %c0_6 = arith.constant 0 : index
    %7 = memref.load %arg1[%c1_5, %c0_6] : memref<2x3xf32, #tpu.memory_space<smem>>
    %8 = vector.broadcast %7 : f32 to vector<1x128xf32>
    %9 = arith.mulf %8, %1 : vector<1x128xf32>
    %10 = arith.addf %6, %9 : vector<1x128xf32>
    %c0_7 = arith.constant 0 : index
    %11 = memref.load %arg2[%c0_7] : memref<3xf32, #tpu.memory_space<smem>>
    %12 = vector.broadcast %11 : f32 to vector<1x128xf32>
    %13 = arith.addf %10, %12 : vector<1x128xf32>
    %c0_8 = arith.constant 0 : index
    %14 = memref.load %arg3[%c0_8] : memref<3xf32, #tpu.memory_space<smem>>
    %cst = arith.constant 0.000000e+00 : f32
    %15 = vector.broadcast %cst : f32 to vector<1x128xf32>
    %16 = arith.subf %15, %13 : vector<1x128xf32>
    %17 = math.exp %16 : vector<1x128xf32>
    %cst_9 = arith.constant 1.000000e+00 : f32
    %18 = vector.broadcast %cst_9 : f32 to vector<1x128xf32>
    %19 = arith.addf %18, %17 : vector<1x128xf32>
    %20 = tpu.reciprocal %19 : vector<1x128xf32> -> vector<1x128xf32>
    %21 = vector.broadcast %14 : f32 to vector<1x128xf32>
    %22 = arith.mulf %21, %20 : vector<1x128xf32>
    %23 = arith.addf %3, %22 : vector<1x128xf32>
    %c0_10 = arith.constant 0 : index
    %c1_11 = arith.constant 1 : index
    %24 = memref.load %arg1[%c0_10, %c1_11] : memref<2x3xf32, #tpu.memory_space<smem>>
    %25 = vector.broadcast %24 : f32 to vector<1x128xf32>
    %26 = arith.mulf %25, %0 : vector<1x128xf32>
    %c1_12 = arith.constant 1 : index
    %c1_13 = arith.constant 1 : index
    %27 = memref.load %arg1[%c1_12, %c1_13] : memref<2x3xf32, #tpu.memory_space<smem>>
    %28 = vector.broadcast %27 : f32 to vector<1x128xf32>
    %29 = arith.mulf %28, %1 : vector<1x128xf32>
    %30 = arith.addf %26, %29 : vector<1x128xf32>
    %c1_14 = arith.constant 1 : index
    %31 = memref.load %arg2[%c1_14] : memref<3xf32, #tpu.memory_space<smem>>
    %32 = vector.broadcast %31 : f32 to vector<1x128xf32>
    %33 = arith.addf %30, %32 : vector<1x128xf32>
    %c1_15 = arith.constant 1 : index
    %34 = memref.load %arg3[%c1_15] : memref<3xf32, #tpu.memory_space<smem>>
    %cst_16 = arith.constant 0.000000e+00 : f32
    %35 = vector.broadcast %cst_16 : f32 to vector<1x128xf32>
    %36 = arith.subf %35, %33 : vector<1x128xf32>
    %37 = math.exp %36 : vector<1x128xf32>
    %cst_17 = arith.constant 1.000000e+00 : f32
    %38 = vector.broadcast %cst_17 : f32 to vector<1x128xf32>
    %39 = arith.addf %38, %37 : vector<1x128xf32>
    %40 = tpu.reciprocal %39 : vector<1x128xf32> -> vector<1x128xf32>
    %41 = vector.broadcast %34 : f32 to vector<1x128xf32>
    %42 = arith.mulf %41, %40 : vector<1x128xf32>
    %43 = arith.addf %23, %42 : vector<1x128xf32>
    %c0_18 = arith.constant 0 : index
    %c2 = arith.constant 2 : index
    %44 = memref.load %arg1[%c0_18, %c2] : memref<2x3xf32, #tpu.memory_space<smem>>
    %45 = vector.broadcast %44 : f32 to vector<1x128xf32>
    %46 = arith.mulf %45, %0 : vector<1x128xf32>
    %c1_19 = arith.constant 1 : index
    %c2_20 = arith.constant 2 : index
    %47 = memref.load %arg1[%c1_19, %c2_20] : memref<2x3xf32, #tpu.memory_space<smem>>
    %48 = vector.broadcast %47 : f32 to vector<1x128xf32>
    %49 = arith.mulf %48, %1 : vector<1x128xf32>
    %50 = arith.addf %46, %49 : vector<1x128xf32>
    %c2_21 = arith.constant 2 : index
    %51 = memref.load %arg2[%c2_21] : memref<3xf32, #tpu.memory_space<smem>>
    %52 = vector.broadcast %51 : f32 to vector<1x128xf32>
    %53 = arith.addf %50, %52 : vector<1x128xf32>
    %c2_22 = arith.constant 2 : index
    %54 = memref.load %arg3[%c2_22] : memref<3xf32, #tpu.memory_space<smem>>
    %cst_23 = arith.constant 0.000000e+00 : f32
    %55 = vector.broadcast %cst_23 : f32 to vector<1x128xf32>
    %56 = arith.subf %55, %53 : vector<1x128xf32>
    %57 = math.exp %56 : vector<1x128xf32>
    %cst_24 = arith.constant 1.000000e+00 : f32
    %58 = vector.broadcast %cst_24 : f32 to vector<1x128xf32>
    %59 = arith.addf %58, %57 : vector<1x128xf32>
    %60 = tpu.reciprocal %59 : vector<1x128xf32> -> vector<1x128xf32>
    %61 = vector.broadcast %54 : f32 to vector<1x128xf32>
    %62 = arith.mulf %61, %60 : vector<1x128xf32>
    %63 = arith.addf %43, %62 : vector<1x128xf32>
    %cst_25 = arith.constant 0.000000e+00 : f32
    %64 = vector.broadcast %cst_25 : f32 to vector<1x128xf32>
    %65 = arith.subf %64, %63 : vector<1x128xf32>
    %66 = math.exp %65 : vector<1x128xf32>
    %cst_26 = arith.constant 1.000000e+00 : f32
    %67 = vector.broadcast %cst_26 : f32 to vector<1x128xf32>
    %68 = arith.addf %67, %66 : vector<1x128xf32>
    %69 = tpu.reciprocal %68 : vector<1x128xf32> -> vector<1x128xf32>
    %c0_27 = arith.constant 0 : index
    %c0_28 = arith.constant 0 : index
    %70 = vector.load %arg6[%c0_27, %c0_28] : memref<1x128xf32, #tpu.memory_space<vmem>>, vector<1x128xf32>
    tpu.vector_store %arg6[%c0_27, %c0_28], %69 {strides = array<i32>} : memref<1x128xf32, #tpu.memory_space<vmem>>, vector<1x128xf32>,
    return
  }
  func.func @transform_0(%arg0: i32) -> (i32, i32) {
    %c0_i32 = arith.constant 0 : i32
    %c0_i32_0 = arith.constant 0 : i32
    %c0_i32_1 = arith.constant 0 : i32
    return %c0_i32, %c0_i32_0 : i32, i32
  }
  func.func @transform_1(%arg0: i32) -> i32 {
    %c0_i32 = arith.constant 0 : i32
    %c0_i32_0 = arith.constant 0 : i32
    return %c0_i32 : i32
  }
  func.func @transform_2(%arg0: i32) -> i32 {
    %c0_i32 = arith.constant 0 : i32
    %c0_i32_0 = arith.constant 0 : i32
    return %c0_i32 : i32
  }
  func.func @transform_3(%arg0: i32) -> i32 {
    %c0_i32 = arith.constant 0 : i32
    %c0_i32_0 = arith.constant 0 : i32
    return %c0_i32 : i32
  }
  func.func @transform_4(%arg0: i32) -> (i32, i32) {
    %c0_i32 = arith.constant 0 : i32
    %c0_i32_0 = arith.constant 0 : i32
    return %c0_i32, %arg0 : i32, i32
  }
  func.func @transform_5(%arg0: i32) -> (i32, i32) {
    %c0_i32 = arith.constant 0 : i32
    %c0_i32_0 = arith.constant 0 : i32
    return %c0_i32, %arg0 : i32, i32
  }
}

</mosaic_0001>

<llo_original>
// kernel: tpu_custom_call.1
$region0: #{tpu_custom_call.1}
  #allocation0 [shape = 'u32[]', space=smem, size = 0x4, offset = 0x4, fixed_abs, tag = 'smem constant byte address 0x4 - core index']
  #allocation1 [shape = 'u32[144,128]{1,0:T(1,128)}', space=vmem, size = 0x12000, scoped, tag = 'internal scratch']
  #allocation2 [shape = 'f32[1]{0:T(128)S(6)}', space=smem, size = 0x200, scoped, tag = 'scoped memory for tpu_custom_call.1']
  %s0 = inlined_call_operand.vmem [shape: f32[2,3], index: 0, kind: input, shape index: {}]
  %s1 = inlined_call_operand.vmem [shape: f32[3], index: 1, kind: input, shape index: {}]
  %s2 = inlined_call_operand.vmem [shape: f32[3], index: 2, kind: input, shape index: {}]
  %s3 = inlined_call_operand.<no memory space> [shape: f32[1], index: 3, kind: input, shape index: {}]
  %s4 = inlined_call_operand.vmem [shape: f32[2,128], index: 4, kind: input, shape index: {}]
  %s5 = inlined_call_operand.hbm [shape: f32[1,128], index: 5, kind: output, shape index: {}]
  %s6 = sld [smem:[#allocation0]]
  $region42: #{tpu_custom_call.1} parent=0
    _
  %s8 = ssub.s32 1, %s6
  %s9 = scalar_select 0, %s8, %s6
  %10 = sst [smem:[#allocation2]] %s3
  $region1: #{tpu_custom_call.1} parent=0
    #allocation3 [shape = 'u8[1024]{0}', space=smem, size = 0x400, scoped, tag = 'input window, operand 0, single buffered']
    #allocation4 [shape = 's32[1]{0}', space=sflag, size = 0x4, scoped, tag = 'scoped memory for tpu_custom_call.1']
    #allocation5 [shape = 's32[1]{0}', space=sflag, size = 0x4, scoped, tag = 'scoped memory for tpu_custom_call.1']
    #allocation6 [shape = 'u8[512]{0}', space=smem, size = 0x200, scoped, tag = 'input window, operand 1, single buffered']
    #allocation7 [shape = 's32[1]{0}', space=sflag, size = 0x4, scoped, tag = 'scoped memory for tpu_custom_call.1']
    #allocation8 [shape = 'u8[512]{0}', space=smem, size = 0x200, scoped, tag = 'input window, operand 2, single buffered']
    #allocation9 [shape = 'u8[512]{0}', space=vmem, size = 0x400, scoped, tag = 'output window, operand 0, single buffered']
    %11 = vsyncpa [#allocation5], 0
    %12 = vsyncpa [#allocation7], 0
    %13 = vsyncpa [#allocation4], 0
    // Predicated region
    $region2: #{tpu_custom_call.1} parent=1 // pred_check
      _
    $region3: #{tpu_custom_call.1} parent=1 // pred_check_branch
      %15 = sbr.rel (0) target = $region5
    $region4: #{tpu_custom_call.1} parent=1 // pred_region
      %s17 = ssub.s32 32, 32
      %18 = vsyncadd [#allocation5], %s17
      %s20 = sshll.u32 %s0, 4
      %s21 = int_to_ptr.vmem [resolvable:$true] %s20
      %23 = dma.vmem_to_smem %s21, 32, [#allocation3], [#allocation5]
    $region5: #{tpu_custom_call.1} parent=1 // pred_fallthru
      _
    // Predicated region
    $region6: #{tpu_custom_call.1} parent=1 // pred_check
      _
    $region7: #{tpu_custom_call.1} parent=1 // pred_check_branch
      %25 = sbr.rel (0) target = $region9
    $region8: #{tpu_custom_call.1} parent=1 // pred_region
      %s27 = ssub.s32 16, 16
      %28 = vsyncadd [#allocation7], %s27
      %s30 = sshll.u32 %s1, 4
      %s31 = int_to_ptr.vmem [resolvable:$true] %s30
      %33 = dma.vmem_to_smem %s31, 16, [#allocation6], [#allocation7]
    $region9: #{tpu_custom_call.1} parent=1 // pred_fallthru
      _
    // Predicated region
    $region10: #{tpu_custom_call.1} parent=1 // pred_check
      _
    $region11: #{tpu_custom_call.1} parent=1 // pred_check_branch
      %35 = sbr.rel (0) target = $region13
    $region12: #{tpu_custom_call.1} parent=1 // pred_region
      %s37 = ssub.s32 16, 16
      %38 = vsyncadd [#allocation7], %s37
      %s40 = sshll.u32 %s2, 4
      %s41 = int_to_ptr.vmem [resolvable:$true] %s40
      %43 = dma.vmem_to_smem %s41, 16, [#allocation8], [#allocation7]
    $region13: #{tpu_custom_call.1} parent=1 // pred_fallthru
      _
    // Predicated region
    $region14: #{tpu_custom_call.1} parent=1 // pred_check
      _
    $region15: #{tpu_custom_call.1} parent=1 // pred_check_branch
      %45 = sbr.rel (0) target = $region17
    $region16: #{tpu_custom_call.1} parent=1 // pred_region
      _
    $region17: #{tpu_custom_call.1} parent=1 // pred_fallthru
      _
    // Predicated region
    $region18: #{tpu_custom_call.1} parent=1 // pred_check
      _
    $region19: #{tpu_custom_call.1} parent=1 // pred_check_branch
      %47 = sbr.rel (0) target = $region21
    $region20: #{tpu_custom_call.1} parent=1 // pred_region
      _
    $region21: #{tpu_custom_call.1} parent=1 // pred_fallthru
      _
    // Predicated region
    $region22: #{tpu_custom_call.1} parent=1 // pred_check
      _
    $region23: #{tpu_custom_call.1} parent=1 // pred_check_branch
      %49 = sbr.rel (0) target = $region25
    $region24: #{tpu_custom_call.1} parent=1 // pred_region
      %50 = dma.done [#allocation5], 32
    $region25: #{tpu_custom_call.1} parent=1 // pred_fallthru
      _
    // Predicated region
    $region26: #{tpu_custom_call.1} parent=1 // pred_check
      _
    $region27: #{tpu_custom_call.1} parent=1 // pred_check_branch
      %52 = sbr.rel (0) target = $region29
    $region28: #{tpu_custom_call.1} parent=1 // pred_region
      %53 = dma.done [#allocation7], 16
    $region29: #{tpu_custom_call.1} parent=1 // pred_fallthru
      _
    // Predicated region
    $region30: #{tpu_custom_call.1} parent=1 // pred_check
      _
    $region31: #{tpu_custom_call.1} parent=1 // pred_check_branch
      %55 = sbr.rel (0) target = $region33
    $region32: #{tpu_custom_call.1} parent=1 // pred_region
      %56 = dma.done [#allocation7], 16
    $region33: #{tpu_custom_call.1} parent=1 // pred_fallthru
      _
    %57 = sfence
    %v58 = vld [vmem:[%s4] sm:$0x1]
    %v59 = vld [vmem:[%s4 + $0x1] sm:$0x1]
    %s60 = sld [smem:[#allocation2]]
    %v61 = vstv %s60
    %s62 = sld [smem:[#allocation3]]
    %v63 = vstv %s62
    %v64 = vmul.f32 %v63, %v58
    %s65 = sld [smem:[#allocation3 + $0x80]]
    %v66 = vstv %s65
    %v67 = vmul.f32 %v66, %v59
    %v68 = vadd.f32 %v64, %v67
    %s69 = sld [smem:[#allocation6]]
    %v70 = vstv %s69
    %v71 = vadd.f32 %v68, %v70
    %s72 = sld [smem:[#allocation8]]
    %v73 = vsub.f32 0.0, %v71
    %v74 = vmul.f32 %v73, 1.442695
    %v75 = vpow.pop %v74
    %v76 = vadd.f32 %v75, 1.0
    %v77 = vrcp.pop %v76
    %v78 = vstv %s72
    %v79 = vmul.f32 %v78, %v77
    %v80 = vadd.f32 %v61, %v79
    %s81 = sld [smem:[#allocation3 + $0x1]]
    %v82 = vstv %s81
    %v83 = vmul.f32 %v82, %v58
    %s84 = sld [smem:[#allocation3 + $0x81]]
    %v85 = vstv %s84
    %v86 = vmul.f32 %v85, %v59
    %v87 = vadd.f32 %v83, %v86
    %s88 = sld [smem:[#allocation6 + $0x1]]
    %v89 = vstv %s88
    %v90 = vadd.f32 %v87, %v89
    %s91 = sld [smem:[#allocation8 + $0x1]]
    %v92 = vsub.f32 0.0, %v90
    %v93 = vmul.f32 %v92, 1.442695
    %v94 = vpow.pop %v93
    %v95 = vadd.f32 %v94, 1.0
    %v96 = vrcp.pop %v95
    %v97 = vstv %s91
    %v98 = vmul.f32 %v97, %v96
    %v99 = vadd.f32 %v80, %v98
    %s100 = sld [smem:[#allocation3 + $0x2]]
    %v101 = vstv %s100
    %v102 = vmul.f32 %v101, %v58
    %s103 = sld [smem:[#allocation3 + $0x82]]
    %v104 = vstv %s103
    %v105 = vmul.f32 %v104, %v59
    %v106 = vadd.f32 %v102, %v105
    %s107 = sld [smem:[#allocation6 + $0x2]]
    %v108 = vstv %s107
    %v109 = vadd.f32 %v106, %v108
    %s110 = sld [smem:[#allocation8 + $0x2]]
    %v111 = vsub.f32 0.0, %v109
    %v112 = vmul.f32 %v111, 1.442695
    %v113 = vpow.pop %v112
    %v114 = vadd.f32 %v113, 1.0
    %v115 = vrcp.pop %v114
    %v116 = vstv %s110
    %v117 = vmul.f32 %v116, %v115
    %v118 = vadd.f32 %v99, %v117
    %v119 = vsub.f32 0.0, %v118
    %v120 = vmul.f32 %v119, 1.442695
    %v121 = vpow.pop %v120
    %v122 = vadd.f32 %v121, 1.0
    %v123 = vrcp.pop %v122
    %124 = vst [vmem:[#allocation9] sm:$0x1] %v123
    // Predicated region
    $region34: #{tpu_custom_call.1} parent=1 // pred_check
      _
    $region35: #{tpu_custom_call.1} parent=1 // pred_check_branch
      %126 = sbr.rel (0) target = $region37
    $region36: #{tpu_custom_call.1} parent=1 // pred_region
      %s128 = ssub.s32 16, 16
      %129 = vsyncadd [#allocation4], %s128
      %s131 = sshll.u32 [#allocation9], 4
      %s132 = int_to_ptr.vmem [resolvable:$true] %s131
      %134 = dma.vmem_to_hbm [thread:$0]  %s132, 16, %s5, [#allocation4]
    $region37: #{tpu_custom_call.1} parent=1 // pred_fallthru
      _
    // Predicated region
    $region38: #{tpu_custom_call.1} parent=1 // pred_check
      _
    $region39: #{tpu_custom_call.1} parent=1 // pred_check_branch
      %136 = sbr.rel (0) target = $region41
    $region40: #{tpu_custom_call.1} parent=1 // pred_region
      %137 = dma.done [#allocation4], 16
    $region41: #{tpu_custom_call.1} parent=1 // pred_fallthru
      _
    %138 = vsyncpa [#allocation4], 1
    %139 = vsyncpa [#allocation5], 1
    %140 = vsyncpa [#allocation7], 1

</llo_original>
